<compile_context>
chip_gen: v5e
topology: v5e:2x2
jax: 0.10.0
libtpu: 0.0.40
codegen_flags: <defaults>
</compile_context>

<pallas_src>
import functools

import jax
import jax.numpy as jnp
from jax.experimental import pallas as pl
from jax.experimental.pallas import tpu as pltpu

LANES = 128
# 8192 rows * 128 lanes * 4 B = 4 MiB per input per grid step.
# Double-buffered: 2 inputs * 2 buffers * 4 MiB = 16 MiB of block buffers.
# vmem_limit_bytes is raised explicitly (32 MiB) so this also fits v5e's
# 16 MiB default scoped VMEM; physical VMEM is 128 MiB (v5e/v6e) / 64 MiB (v7x).
TILE_ROWS = 8192
# Below this element count, plain fused XLA beats pallas_call dispatch cost.
MIN_PALLAS_ELEMENTS = 128 * 1024
# Outer grid axis: sharded across TensorCores on v7x megacore; serial elsewhere.
NUM_SPLITS = 2


def _mse_kernel(o_ref, t_ref, acc_ref, *, rows, tile_rows, tiles_per_split,
                needs_mask):
    """Accumulate sum((o - t)^2) of this tile into this split's (1,8,128) block."""
    c = pl.program_id(0)   # split (TensorCore) index
    i = pl.program_id(1)   # tile index within the split

    @pl.when(i == 0)
    def _():
        acc_ref[...] = jnp.zeros_like(acc_ref)

    d = o_ref[...].astype(jnp.float32) - t_ref[...].astype(jnp.float32)
    sq = d * d

    def fold(x):
        # Consecutive groups of 8 rows stay within (8,128) hardware tiles, so
        # this is pure VPU adds (no per-step XLU reduction, no scalar carry).
        return x.reshape(tile_rows // 8, 8, LANES).sum(axis=0, keepdims=True)

    if needs_mask:
        row_start = (c * tiles_per_split + i) * tile_rows
        is_ragged = row_start + tile_rows > rows

        # Mask only on the (at most one per split) ragged / out-of-range step;
        # all full tiles take the cheap unmasked path.
        @pl.when(is_ragged)
        def _():
            row_idx = row_start + jax.lax.broadcasted_iota(
                jnp.int32, (tile_rows, LANES), 0)
            acc_ref[...] += fold(
                jnp.where(row_idx < rows, sq, jnp.float32(0.0)))

        @pl.when(jnp.logical_not(is_ragged))
        def _():
            acc_ref[...] += fold(sq)
    else:
        acc_ref[...] += fold(sq)


def custom_mse_loss(outputs, targets, *, min_pallas_elements=MIN_PALLAS_ELEMENTS,
                    tile_rows=TILE_ROWS):
    """Pallas equivalent of CustomMSELoss.forward (mean-reduction MSE)."""
    # Mirror the PyTorch module: accept tuple/list targets, take first element.
    if isinstance(targets, (tuple, list)):
        targets = targets[0]

    total_n = outputs.size
    if total_n == 0:
        # torch mse_loss on empty tensors yields NaN.
        return jnp.float32(jnp.nan)

    # Compute in f32 (matches torch default f32 path).
    # TODO(synk): for bf16/fp8 inputs, keep native dtype in the kernel with
    # (16,128)/(32,128) sublane-aligned tiles instead of this upcast pass.
    o = outputs if outputs.dtype == jnp.float32 else outputs.astype(jnp.float32)
    t = targets if targets.dtype == jnp.float32 else targets.astype(jnp.float32)

    # Small-input fallback: pallas_call dispatch + pipeline warmup costs more
    # than the whole reduction for tiny losses.
    if total_n < max(min_pallas_elements, 8 * LANES):
        d = jnp.ravel(o) - jnp.ravel(t)
        return jnp.sum(d * d) / jnp.float32(total_n)

    o_flat = jnp.ravel(o)
    t_flat = jnp.ravel(t)

    # Bulk region: largest prefix filling whole (8,128) tiles.
    rows_full8 = (total_n // (8 * LANES)) * 8
    n_main = rows_full8 * LANES

    # TODO(synk): for non-1024-aligned total_n this prefix slice materializes a
    # copy of both operands; feed the full flat arrays with an element-masked
    # 1-D BlockSpec to remove it if ragged sizes dominate.
    o2d = o_flat[:n_main].reshape(rows_full8, LANES)
    t2d = t_flat[:n_main].reshape(rows_full8, LANES)

    tile_rows = max(8, (min(tile_rows, rows_full8) // 8) * 8)
    num_tiles = pl.cdiv(rows_full8, tile_rows)
    num_splits = NUM_SPLITS if num_tiles >= NUM_SPLITS else 1
    tiles_per_split = pl.cdiv(num_tiles, num_splits)
    needs_mask = (rows_full8 % tile_rows != 0) or (num_tiles % num_splits != 0)

    kernel = functools.partial(
        _mse_kernel,
        rows=rows_full8,
        tile_rows=tile_rows,
        tiles_per_split=tiles_per_split,
        needs_mask=needs_mask,
    )

    def in_map(c, i):
        # Clamp so the (at most one) surplus tile of the last split stays in
        # bounds; its contribution is zeroed by the in-kernel row mask.
        return (jnp.minimum(c * tiles_per_split + i, num_tiles - 1), 0)

    tile_bytes = tile_rows * LANES * 4
    # 2 inputs x 2 pipeline buffers x tile_bytes, plus headroom; explicit so
    # v5e's 16 MiB default scoped VMEM does not OOM at 8192-row tiles, and
    # capped well under v7x's 64 MiB physical VMEM per TensorCore.
    vmem_limit = int(min(48 * 1024 * 1024, max(32 * 1024 * 1024, 5 * tile_bytes)))

    acc = pl.pallas_call(
        kernel,
        out_shape=jax.ShapeDtypeStruct((num_splits, 8, LANES), jnp.float32),
        grid_spec=pltpu.PrefetchScalarGridSpec(
            num_scalar_prefetch=0,
            grid=(num_splits, tiles_per_split),
            in_specs=[
                pl.BlockSpec((tile_rows, LANES), in_map),
                pl.BlockSpec((tile_rows, LANES), in_map),
            ],
            # Per-split accumulator: constant inner block index keeps it
            # resident in VMEM across the whole inner ("arbitrary") loop.
            out_specs=pl.BlockSpec((1, 8, LANES), lambda c, i: (c, 0, 0)),
        ),
        compiler_params=pltpu.CompilerParams(
            dimension_semantics=("parallel", "arbitrary"),
            vmem_limit_bytes=vmem_limit,
        ),
        cost_estimate=pl.CostEstimate(
            flops=3 * n_main, transcendentals=0, bytes_accessed=8 * n_main),
    )(o2d, t2d)

    total_sum = jnp.sum(acc)

    if n_main < total_n:
        # Ragged remainder (< 1024 elements): negligible, plain JAX.
        d_tail = o_flat[n_main:] - t_flat[n_main:]
        total_sum = total_sum + jnp.sum(d_tail * d_tail)

    return total_sum / jnp.float32(total_n)


if __name__ == "__main__":
    key = jax.random.PRNGKey(0)

    def check(shape, *, as_tuple=False, **kwargs):
        global key
        key, k1, k2 = jax.random.split(key, 3)
        o = jax.random.normal(k1, shape, dtype=jnp.float32)
        t = jax.random.normal(k2, shape, dtype=jnp.float32)
        loss = custom_mse_loss(o, (t,) if as_tuple else t, **kwargs)
        jax.block_until_ready(loss)
        ref = jnp.mean((o - t) ** 2)
        assert jnp.allclose(loss, ref, rtol=1e-5, atol=1e-6), (shape, loss, ref)

    # 1) Module-sized input (batch=2, C=4, H=16, W=16), tuple targets:
    #    exercises the small-input fallback path.
    check((2, 4, 16, 16), as_tuple=True)

    # 2) Force the Pallas path, even tile split, no ragged tail:
    #    8192 elems -> 64 rows, tile_rows=16 -> grid (2, 2).
    check((2, 4, 32, 32), min_pallas_elements=0, tile_rows=16)

    # 3) Force the Pallas path with odd tile count + ragged last tile +
    #    non-1024-aligned total (plain-JAX remainder): 5157 elems -> 40 rows.
    check((3, 1719), min_pallas_elements=0, tile_rows=16)

    # 4) Default configuration on a moderate input (single full tile).
    check((2, 4, 128, 256))

    print("KERNEL_OK")
</pallas_src>

<mosaic_0001>
module attributes {stable_mosaic.version = 11 : i64} {
  func.func @_mse_kernel(%arg0: i32, %arg1: i32, %arg2: memref<16x128xf32, #tpu.memory_space<vmem>>, %arg3: memref<16x128xf32, #tpu.memory_space<vmem>>, %arg4: memref<1x8x128xf32, #tpu.memory_space<vmem>>) attributes {dimension_semantics = [#tpu.dimension_semantics<parallel>, #tpu.dimension_semantics<arbitrary>], iteration_bounds = array<i64: 2, 2>, scalar_prefetch = 0 : i64, scratch_operands = 0 : i64, tpu.core_type = #tpu.core_type<tc>, window_params = [{transform_indices = @transform_0, window_bounds = array<i64: 16, 128>}, {transform_indices = @transform_1, window_bounds = array<i64: 16, 128>}, {transform_indices = @transform_2, window_bounds = array<i64: 1, 8, 128>}]} {
    %c0_i32 = arith.constant 0 : i32
    %0 = arith.cmpi eq, %arg1, %c0_i32 : i32
    %1 = arith.extui %0 : i1 to i32
    %c0_i32_0 = arith.constant 0 : i32
    %2 = arith.cmpi ne, %1, %c0_i32_0 : i32
    scf.if %2 {
      %cst_10 = arith.constant 0.000000e+00 : f32
      %13 = vector.broadcast %cst_10 : f32 to vector<1x8x128xf32>
      %c0_11 = arith.constant 0 : index
      %c0_12 = arith.constant 0 : index
      %c0_13 = arith.constant 0 : index
      %14 = vector.load %arg4[%c0_11, %c0_12, %c0_13] : memref<1x8x128xf32, #tpu.memory_space<vmem>>, vector<1x8x128xf32>
      tpu.vector_store %arg4[%c0_11, %c0_12, %c0_13], %13 {strides = array<i32>} : memref<1x8x128xf32, #tpu.memory_space<vmem>>, vector<1x8x128xf32>,
    } else {
    }
    %c0 = arith.constant 0 : index
    %c0_1 = arith.constant 0 : index
    %3 = vector.load %arg2[%c0, %c0_1] : memref<16x128xf32, #tpu.memory_space<vmem>>, vector<16x128xf32>
    %c0_2 = arith.constant 0 : index
    %c0_3 = arith.constant 0 : index
    %4 = vector.load %arg3[%c0_2, %c0_3] : memref<16x128xf32, #tpu.memory_space<vmem>>, vector<16x128xf32>
    %5 = arith.subf %3, %4 : vector<16x128xf32>
    %6 = arith.mulf %5, %5 : vector<16x128xf32>
    %c0_4 = arith.constant 0 : index
    %c0_5 = arith.constant 0 : index
    %c0_6 = arith.constant 0 : index
    %7 = vector.load %arg4[%c0_4, %c0_5, %c0_6] : memref<1x8x128xf32, #tpu.memory_space<vmem>>, vector<1x8x128xf32>
    %8 = vector.shape_cast %6 : vector<16x128xf32> to vector<2x8x128xf32>
    %cst = arith.constant dense<0.000000e+00> : vector<8x128xf32>
    %9 = vector.multi_reduction <add>, %8, %cst [0] : vector<2x8x128xf32> to vector<8x128xf32>
    %10 = vector.shape_cast %9 : vector<8x128xf32> to vector<1x8x128xf32>
    %11 = arith.addf %7, %10 : vector<1x8x128xf32>
    %c0_7 = arith.constant 0 : index
    %c0_8 = arith.constant 0 : index
    %c0_9 = arith.constant 0 : index
    %12 = vector.load %arg4[%c0_7, %c0_8, %c0_9] : memref<1x8x128xf32, #tpu.memory_space<vmem>>, vector<1x8x128xf32>
    tpu.vector_store %arg4[%c0_7, %c0_8, %c0_9], %11 {strides = array<i32>} : memref<1x8x128xf32, #tpu.memory_space<vmem>>, vector<1x8x128xf32>,
    return
  }
  func.func @transform_0(%arg0: i32, %arg1: i32) -> (i32, i32) {
    %c2_i32 = arith.constant 2 : i32
    %0 = arith.muli %arg0, %c2_i32 : i32
    %1 = arith.addi %0, %arg1 : i32
    %c3_i32 = arith.constant 3 : i32
    %2 = arith.minsi %1, %c3_i32 : i32
    %c0_i32 = arith.constant 0 : i32
    %c0_i32_0 = arith.constant 0 : i32
    return %2, %c0_i32 : i32, i32
  }
  func.func @transform_1(%arg0: i32, %arg1: i32) -> (i32, i32) {
    %c2_i32 = arith.constant 2 : i32
    %0 = arith.muli %arg0, %c2_i32 : i32
    %1 = arith.addi %0, %arg1 : i32
    %c3_i32 = arith.constant 3 : i32
    %2 = arith.minsi %1, %c3_i32 : i32
    %c0_i32 = arith.constant 0 : i32
    %c0_i32_0 = arith.constant 0 : i32
    return %2, %c0_i32 : i32, i32
  }
  func.func @transform_2(%arg0: i32, %arg1: i32) -> (i32, i32, i32) {
    %c0_i32 = arith.constant 0 : i32
    %c0_i32_0 = arith.constant 0 : i32
    %c0_i32_1 = arith.constant 0 : i32
    return %arg0, %c0_i32, %c0_i32_0 : i32, i32, i32
  }
}

</mosaic_0001>

<llo_original>
// kernel: tpu_custom_call.1
$region0: #{tpu_custom_call.1}
  #allocation0 [shape = 'u32[]', space=smem, size = 0x4, offset = 0x4, fixed_abs, tag = 'smem constant byte address 0x4 - core index']
  #allocation1 [shape = 'u32[72,128]{1,0:T(1,128)}', space=vmem, size = 0x9000, scoped, tag = 'internal scratch']
  %s0 = inlined_call_operand.hbm [shape: f32[64,128], index: 0, kind: input, shape index: {}]
  %s1 = inlined_call_operand.hbm [shape: f32[64,128], index: 1, kind: input, shape index: {}]
  %s2 = inlined_call_operand.hbm [shape: f32[2,8,128], index: 2, kind: output, shape index: {}]
  %s3 = sld [smem:[#allocation0]]
  $region53: #{tpu_custom_call.1} parent=0
    _
  %s5 = ssub.s32 1, %s3
  %s6 = scalar_select 0, %s5, %s3
  $region1: #{tpu_custom_call.1} parent=0
    #allocation2 [shape = 'u8[16384]{0}', space=vmem, size = 0x4000, scoped, tag = 'input window, operand 0']
    #allocation3 [shape = 's32[2]{0}', space=sflag, size = 0x8, scoped, tag = 'scoped memory for tpu_custom_call.1']
    #allocation4 [shape = 's32[2]{0}', space=sflag, size = 0x8, scoped, tag = 'scoped memory for tpu_custom_call.1']
    #allocation5 [shape = 'u8[16384]{0}', space=vmem, size = 0x4000, scoped, tag = 'input window, operand 1']
    #allocation6 [shape = 's32[2]{0}', space=sflag, size = 0x8, scoped, tag = 'scoped memory for tpu_custom_call.1']
    #allocation7 [shape = 'u8[8192]{0}', space=vmem, size = 0x2000, scoped, tag = 'output window, operand 0']
    %7 = vsyncpa [#allocation3], 0
    %s8 = scalar_lea.sflag [#allocation3], 1
    %9 = vsyncpa %s8, 0
    %10 = vsyncpa [#allocation6], 0
    %s11 = scalar_lea.sflag [#allocation6], 1
    %12 = vsyncpa %s11, 0
    %13 = vsyncpa [#allocation4], 0
    %s14 = scalar_lea.sflag [#allocation4], 1
    %15 = vsyncpa %s14, 0
    loop: start=0, step=1, limit=6
    $region2: #{tpu_custom_call.1} parent=1 // loop_pre_header
      _
    $region3: #{tpu_custom_call.1} parent=1 // loop_header
      %s17 = sphi 0, %s21
      %p18 = scmp.ge.s32.totalorder %s17, 6
      %s24 = sphi 0, %s36
      %s25 = sphi 0, %s32
      %s26 = sphi 0, %s24
      %s27 = sphi 0, %s25
      %s28 = sphi 0, %s26
      %s29 = sphi 0, %s27
      %s47 = sphi 0, %s49
      %s50 = sphi 0, %s47
      %s51 = sphi 0, %s50
      %s67 = sphi 0, %s51
      %s81 = sphi 0, %s83
      %s84 = sphi 0, %s81
      %s85 = sphi 0, %s84
      %s101 = sphi 0, %s85
      %s107 = sphi 0, %s109
      %s110 = sphi 0, %s107
      %s111 = sphi 0, %s110
      %s127 = sphi 0, %s111
    $region4: #{tpu_custom_call.1} parent=1 // loop_header_branch
      %20 = sbr.rel (%p18) target = $region8
    $region5: #{tpu_custom_call.1} parent=1 // loop_body
      %s22 = ssub.s32 %s17, 1
      %s23 = ssub.s32 %s17, 2
      %s30 = sadd.s32 1, %s25
      %p31 = scmp.ge.s32.totalorder %s30, 2
      %s32 = scalar_select %p31, 0, %s30
      %s33 = sadd.s32 1, %s24
      %s34 = scalar_select %p31, %s33, %s24
      %p35 = scmp.ge.s32.totalorder %s34, 2
      %s36 = scalar_select %p35, 0, %s34
      %s37 = smul.u32 %s24, 2
      %s38 = sadd.s32 %s37, %s25
      %p39 = scmp.lt.s32.totalorder %s38, 3
      %s40 = scalar_select %p39, %s38, 3
      %s41 = smul.u32 %s36, 2
      %s42 = sadd.s32 %s41, %s32
      %p43 = scmp.lt.s32.totalorder %s42, 3
      %s44 = scalar_select %p43, %s42, 3
      %s45 = ssub.s32 %s40, %s44
      %p46 = scmp.eq.s32.totalorder %s45, 0
      %s48 = sadd.s32 %s47, 1
      %s49 = scalar_select %p46, %s47, %s48
      %p52 = pneg %p46
      %p53 = scmp.eq.s32.totalorder %s17, 3
      %p54 = por %p52, %p53
      %p55 = scmp.ne.s32.totalorder %s47, %s50
      %p56 = scmp.eq.s32.totalorder %s17, 0
      %p57 = por %p55, %p56
      %p58 = scmp.ne.s32.totalorder %s47, %s50
      %p59 = scmp.eq.s32.totalorder %s22, 3
      %p60 = por %p58, %p59
      %p61 = scmp.ne.s32.totalorder %s50, %s51
      %p62 = scmp.eq.s32.totalorder %s22, 0
      %p63 = por %p61, %p62
      %p64 = scmp.ne.s32.totalorder %s50, %s51
      %p65 = scmp.eq.s32.totalorder %s23, 3
      %p66 = por %p64, %p65
      %p68 = scmp.ne.s32.totalorder %s51, %s67
      %p69 = scmp.eq.s32.totalorder %s23, 0
      %p70 = por %p68, %p69
      %s71 = smul.u32 %s24, 2
      %s72 = sadd.s32 %s71, %s25
      %p73 = scmp.lt.s32.totalorder %s72, 3
      %s74 = scalar_select %p73, %s72, 3
      %s75 = smul.u32 %s36, 2
      %s76 = sadd.s32 %s75, %s32
      %p77 = scmp.lt.s32.totalorder %s76, 3
      %s78 = scalar_select %p77, %s76, 3
      %s79 = ssub.s32 %s74, %s78
      %p80 = scmp.eq.s32.totalorder %s79, 0
      %s82 = sadd.s32 %s81, 1
      %s83 = scalar_select %p80, %s81, %s82
      %p86 = pneg %p80
      %p87 = scmp.eq.s32.totalorder %s17, 3
      %p88 = por %p86, %p87
      %p89 = scmp.ne.s32.totalorder %s81, %s84
      %p90 = scmp.eq.s32.totalorder %s17, 0
      %p91 = por %p89, %p90
      %p92 = scmp.ne.s32.totalorder %s81, %s84
      %p93 = scmp.eq.s32.totalorder %s22, 3
      %p94 = por %p92, %p93
      %p95 = scmp.ne.s32.totalorder %s84, %s85
      %p96 = scmp.eq.s32.totalorder %s22, 0
      %p97 = por %p95, %p96
      %p98 = scmp.ne.s32.totalorder %s84, %s85
      %p99 = scmp.eq.s32.totalorder %s23, 3
      %p100 = por %p98, %p99
      %p102 = scmp.ne.s32.totalorder %s85, %s101
      %p103 = scmp.eq.s32.totalorder %s23, 0
      %p104 = por %p102, %p103
      %s105 = ssub.s32 %s24, %s36
      %p106 = scmp.eq.s32.totalorder %s105, 0
      %s108 = sadd.s32 %s107, 1
      %s109 = scalar_select %p106, %s107, %s108
      %p112 = pneg %p106
      %p113 = scmp.eq.s32.totalorder %s17, 3
      %p114 = por %p112, %p113
      %p115 = scmp.ne.s32.totalorder %s107, %s110
      %p116 = scmp.eq.s32.totalorder %s17, 0
      %p117 = por %p115, %p116
      %p118 = scmp.ne.s32.totalorder %s107, %s110
      %p119 = scmp.eq.s32.totalorder %s22, 3
      %p120 = por %p118, %p119
      %p121 = scmp.ne.s32.totalorder %s110, %s111
      %p122 = scmp.eq.s32.totalorder %s22, 0
      %p123 = por %p121, %p122
      %p124 = scmp.ne.s32.totalorder %s110, %s111
      %p125 = scmp.eq.s32.totalorder %s23, 3
      %p126 = por %p124, %p125
      %p128 = scmp.ne.s32.totalorder %s111, %s127
      %p129 = scmp.eq.s32.totalorder %s23, 0
      %p130 = por %p128, %p129
      %p131 = scmp.le.s32.totalorder 1, %s17
      %p132 = scmp.lt.s32.totalorder %s17, 5
      %p133 = pnand %p131, %p132
      %p134 = pneg %p133
      // Predicated region
      $region9: #{tpu_custom_call.1} parent=5 // pred_check
        _
      $region10: #{tpu_custom_call.1} parent=5 // pred_check_branch
        %136 = sbr.rel (%p133) target = $region12
      $region11: #{tpu_custom_call.1} parent=5 // pred_region
        %s137 = ssub.s32 %s17, 1
      $region12: #{tpu_custom_call.1} parent=5 // pred_fallthru
        _
      %p138 = scmp.lt.s32.totalorder %s17, 4
      // Predicated region
      $region13: #{tpu_custom_call.1} parent=5 // pred_check
        %p139 = pneg %p138
      $region14: #{tpu_custom_call.1} parent=5 // pred_check_branch
        %141 = sbr.rel (%p139) target = $region16
      $region15: #{tpu_custom_call.1} parent=5 // pred_region
        // Predicated region
        $region17: #{tpu_custom_call.1} parent=15 // pred_check
          %p142 = pneg %p57
        $region18: #{tpu_custom_call.1} parent=15 // pred_check_branch
          %144 = sbr.rel (%p142) target = $region20
        $region19: #{tpu_custom_call.1} parent=15 // pred_region
          %s145 = sand.u32 %s47, 1
          %s146 = scalar_lea.sflag [#allocation3], %s145
          %s147 = sand.u32 %s47, 1
          %s148 = smul.addr %s147, 16
          %s149 = scalar_lea.vmem [#allocation2], %s148
          %s150 = smul.u32 %s24, 2
          %s151 = sadd.s32 %s150, %s25
          %p152 = scmp.lt.s32.totalorder %s151, 3
          %s153 = scalar_select %p152, %s151, 3
          %s154 = smul.u32 2, %s153
          %156 = vsyncadd %s146, 0
          %s157 = smul.addr %s154, 8
          %s158 = scalar_lea.hbm %s0, %s157
          %s159 = sshll.u32 %s158, 4
          %s160 = int_to_ptr.hbm [resolvable:$true] %s159
          %s161 = sshll.u32 %s149, 4
          %s162 = int_to_ptr.vmem [resolvable:$true] %s161
          %167 = dma.hbm_to_vmem [thread:$0]  %s160, 256, %s162, %s146, 128, 128, 8
        $region20: #{tpu_custom_call.1} parent=15 // pred_fallthru
          _
        // Predicated region
        $region21: #{tpu_custom_call.1} parent=15 // pred_check
          %p168 = pneg %p91
        $region22: #{tpu_custom_call.1} parent=15 // pred_check_branch
          %170 = sbr.rel (%p168) target = $region24
        $region23: #{tpu_custom_call.1} parent=15 // pred_region
          %s171 = sand.u32 %s81, 1
          %s172 = scalar_lea.sflag [#allocation6], %s171
          %s173 = sand.u32 %s81, 1
          %s174 = smul.addr %s173, 16
          %s175 = scalar_lea.vmem [#allocation5], %s174
          %s176 = smul.u32 %s24, 2
          %s177 = sadd.s32 %s176, %s25
          %p178 = scmp.lt.s32.totalorder %s177, 3
          %s179 = scalar_select %p178, %s177, 3
          %s180 = smul.u32 2, %s179
          %182 = vsyncadd %s172, 0
          %s183 = smul.addr %s180, 8
          %s184 = scalar_lea.hbm %s1, %s183
          %s185 = sshll.u32 %s184, 4
          %s186 = int_to_ptr.hbm [resolvable:$true] %s185
          %s187 = sshll.u32 %s175, 4
          %s188 = int_to_ptr.vmem [resolvable:$true] %s187
          %193 = dma.hbm_to_vmem [thread:$0]  %s186, 256, %s188, %s172, 128, 128, 8
        $region24: #{tpu_custom_call.1} parent=15 // pred_fallthru
          _
      $region16: #{tpu_custom_call.1} parent=5 // pred_fallthru
        _
      %p194 = scmp.le.s32.totalorder 1, %s17
      %p195 = scmp.lt.s32.totalorder %s17, 5
      %p196 = pnand %p194, %p195
      %p197 = pneg %p196
      // Predicated region
      $region25: #{tpu_custom_call.1} parent=5 // pred_check
        _
      $region26: #{tpu_custom_call.1} parent=5 // pred_check_branch
        %199 = sbr.rel (%p196) target = $region28
      $region27: #{tpu_custom_call.1} parent=5 // pred_region
        %s200 = ssub.s32 %s17, 1
        %s201 = sand.u32 %s50, 1
        %s202 = scalar_lea.sflag [#allocation3], %s201
        %s203 = sand.u32 %s50, 1
        %s204 = smul.addr %s203, 16
        %s205 = scalar_lea.vmem [#allocation2], %s204
        // Predicated region
        $region29: #{tpu_custom_call.1} parent=27 // pred_check
          %p206 = pneg %p63
        $region30: #{tpu_custom_call.1} parent=27 // pred_check_branch
          %208 = sbr.rel (%p206) target = $region32
        $region31: #{tpu_custom_call.1} parent=27 // pred_region
          %210 = dma.done %s202, 256
        $region32: #{tpu_custom_call.1} parent=27 // pred_fallthru
          _
        %s211 = sand.u32 %s84, 1
        %s212 = scalar_lea.sflag [#allocation6], %s211
        %s213 = sand.u32 %s84, 1
        %s214 = smul.addr %s213, 16
        %s215 = scalar_lea.vmem [#allocation5], %s214
        // Predicated region
        $region33: #{tpu_custom_call.1} parent=27 // pred_check
          %p216 = pneg %p97
        $region34: #{tpu_custom_call.1} parent=27 // pred_check_branch
          %218 = sbr.rel (%p216) target = $region36
        $region35: #{tpu_custom_call.1} parent=27 // pred_region
          %220 = dma.done %s212, 256
        $region36: #{tpu_custom_call.1} parent=27 // pred_fallthru
          _
        %s221 = sand.u32 %s50, 1
        %s222 = scalar_lea.sflag [#allocation3], %s221
        %s223 = sand.u32 %s50, 1
        %s224 = smul.addr %s223, 16
        %s225 = scalar_lea.vmem [#allocation2], %s224
        %p226 = pneg %p63
        %p227 = pneg %p60
        %s228 = sand.u32 %s84, 1
        %s229 = scalar_lea.sflag [#allocation6], %s228
        %s230 = sand.u32 %s84, 1
        %s231 = smul.addr %s230, 16
        %s232 = scalar_lea.vmem [#allocation5], %s231
        %p233 = pneg %p97
        %p234 = pneg %p94
        %p235 = pneg %p123
        %p236 = pneg %p120
        %s237 = sand.u32 %s110, 1
        %s238 = scalar_lea.sflag [#allocation4], %s237
        %s239 = sand.u32 %s110, 1
        %s240 = smul.addr %s239, 8
        %s241 = scalar_lea.vmem [#allocation7], %s240
        %s242 = smul.u32 %s26, 2
        %s243 = sadd.s32 %s242, %s27
        %p244 = scmp.lt.s32.totalorder %s243, 3
        %s245 = scalar_select %p244, %s243, 3
        %s246 = smul.u32 2, %s245
        %s247 = smul.u32 %s26, 2
        %s248 = sadd.s32 %s247, %s27
        %p249 = scmp.lt.s32.totalorder %s248, 3
        %s250 = scalar_select %p249, %s248, 3
        %s251 = smul.u32 2, %s250
        %p252 = scmp.eq.s32.totalorder %s27, 0
        // Predicated region
        $region37: #{tpu_custom_call.1} parent=27 // pred_check
          %p253 = pneg %p252
        $region38: #{tpu_custom_call.1} parent=27 // pred_check_branch
          %255 = sbr.rel (%p253) target = $region40
        $region39: #{tpu_custom_call.1} parent=27 // pred_region
          %256 = vst [vmem:[%s241] sm:$0xff] 0.0
        $region40: #{tpu_custom_call.1} parent=27 // pred_fallthru
          _
        %v257 = vld [vmem:[%s205] sm:$0xff]
        %v258 = vld [vmem:[%s205 + $0x8] sm:$0xff]
        %v259 = vld [vmem:[%s215] sm:$0xff]
        %v260 = vld [vmem:[%s215 + $0x8] sm:$0xff]
        %v261 = vsub.f32 %v257, %v259
        %v262 = vsub.f32 %v258, %v260
        %v263 = vmul.f32 %v261, %v261
        %v264 = vmul.f32 %v262, %v262
        %v265 = vld [vmem:[%s241] sm:$0xff]
        %v266 = vadd.f32 %v263, %v264
        %v267 = vadd.f32 %v265, %v266
        %268 = vst [vmem:[%s241] sm:$0xff] %v267
        %s269 = sand.u32 %s110, 1
        %s270 = scalar_lea.sflag [#allocation4], %s269
        %s271 = sand.u32 %s110, 1
        %s272 = smul.addr %s271, 8
        %s273 = scalar_lea.vmem [#allocation7], %s272
        // Predicated region
        $region41: #{tpu_custom_call.1} parent=27 // pred_check
          %p274 = pneg %p120
        $region42: #{tpu_custom_call.1} parent=27 // pred_check_branch
          %276 = sbr.rel (%p274) target = $region44
        $region43: #{tpu_custom_call.1} parent=27 // pred_region
          %278 = vsyncadd %s270, 0
          %s279 = smul.addr %s26, 8
          %s280 = scalar_lea.hbm %s2, %s279
          %s282 = sshll.u32 %s273, 4
          %s283 = int_to_ptr.vmem [resolvable:$true] %s282
          %s284 = sshll.u32 %s280, 4
          %s285 = int_to_ptr.hbm [resolvable:$true] %s284
          %287 = dma.vmem_to_hbm [thread:$0]  %s283, 128, %s285, %s270
        $region44: #{tpu_custom_call.1} parent=27 // pred_fallthru
          _
      $region28: #{tpu_custom_call.1} parent=5 // pred_fallthru
        _
      %p288 = scmp.le.s32.totalorder 2, %s17
      // Predicated region
      $region45: #{tpu_custom_call.1} parent=5 // pred_check
        %p289 = pneg %p288
      $region46: #{tpu_custom_call.1} parent=5 // pred_check_branch
        %291 = sbr.rel (%p289) target = $region48
      $region47: #{tpu_custom_call.1} parent=5 // pred_region
        %s292 = ssub.s32 %s17, 2
        // Predicated region
        $region49: #{tpu_custom_call.1} parent=47 // pred_check
          %p293 = pneg %p126
        $region50: #{tpu_custom_call.1} parent=47 // pred_check_branch
          %295 = sbr.rel (%p293) target = $region52
        $region51: #{tpu_custom_call.1} parent=47 // pred_region
          %s296 = sand.u32 %s111, 1
          %s297 = scalar_lea.sflag [#allocation4], %s296
          %s298 = sand.u32 %s111, 1
          %s299 = smul.addr %s298, 8
          %s300 = scalar_lea.vmem [#allocation7], %s299
          %302 = dma.done %s297, 128
        $region52: #{tpu_custom_call.1} parent=47 // pred_fallthru
          _
      $region48: #{tpu_custom_call.1} parent=5 // pred_fallthru
        _
    $region6: #{tpu_custom_call.1} parent=1 // loop_footer
      %s21 = sadd.s32 1, %s17
    $region7: #{tpu_custom_call.1} parent=1 // loop_footer_branch
      %16 = sbr.rel target = $region3
    $region8: #{tpu_custom_call.1} parent=1 // loop_exit
      _
    %303 = vsyncpa [#allocation3], 1
    %s304 = scalar_lea.sflag [#allocation3], 1
    %305 = vsyncpa %s304, 1
    %306 = vsyncpa [#allocation6], 1
    %s307 = scalar_lea.sflag [#allocation6], 1
    %308 = vsyncpa %s307, 1
    %309 = vsyncpa [#allocation4], 1
    %s310 = scalar_lea.sflag [#allocation4], 1
    %311 = vsyncpa %s310, 1

</llo_original>
